<compile_context>
chip_gen: v5e
topology: v5e:2x2
jax: 0.10.0
libtpu: 0.0.40
codegen_flags: <defaults>
</compile_context>

<pallas_src>
import jax
import jax.numpy as jnp
from jax.experimental import pallas as pl
from jax.experimental.pallas import tpu as pltpu

NUM_TIMESTEPS = 20000
AUX_LOSS_WEIGHT = 1.0
IMG_CH = 3             # channels=3
CTX_CH = 3             # context_channels=3
HIDDEN = 32            # stand-in denoiser hidden width (per pixel)
MAX_TILE_LANES = 4096  # lanes per tile after packing; ~9 MiB VMEM at G=8 -> safe on v5e/v6e/v7x
ACP_FLOOR = 1e-12      # float32 cumprod underflow guard


def _pick_packing(hw, max_tile=MAX_TILE_LANES):
    """Pick pixel-group factor G (G*C channels on sublanes) and a lane tile size.

    Returns (G, TILE) with hw % (G*128) == 0, TILE a multiple of 128 dividing hw//G.
    """
    for g in (8, 4, 2, 1):
        if hw % (g * 128) == 0:
            lanes = hw // g
            best, t = 128, 128
            while t <= min(lanes, max_tile):
                if lanes % t == 0:
                    best = t
                t += 128
            return g, best
    raise ValueError("h*w must be a multiple of 128")


def _diffusion_kernel(sched_ref,
                      x_ref, xr_ref, nz_ref,
                      wcx_ref, wcr_ref, bc_ref,
                      w1x_ref, w1c_ref, w1t_ref, b1_ref,
                      w2_ref, b2_ref,
                      out_noise_ref, out_aux_ref):
    """One (G*C, TILE) pixel tile of the fused diffusion training forward.

    Writes per-tile sublane-reduced squared-error partial sums (lane-dense (1, TILE) blocks);
    the final scalar reduction happens once in the wrapper.
    """
    ni = pl.program_id(0)   # sample index

    # Per-sample diffusion scalars from SMEM (scalar prefetch).
    sa = sched_ref[0, ni]     # sqrt(alpha_cumprod[t])
    sb = sched_ref[1, ni]     # sqrt(1 - alpha_cumprod[t])
    sr = sched_ref[2, ni]     # sqrt(1 / alpha_cumprod[t])
    srm1 = sched_ref[3, ni]   # sqrt(1 / alpha_cumprod[t] - 1)
    tn = sched_ref[4, ni]     # t / num_timesteps

    x = x_ref[...]                                # (G*C, TILE) clean pixels, f32
    xr = xr_ref[...].astype(jnp.float32)          # reference frame noise (bf16 in HBM)
    nz = nz_ref[...].astype(jnp.float32)          # diffusion noise (bf16 in HBM)

    # q_sample (clip_noise='full' -> no clipping)
    xt = sa * x + sb * nz

    # context_fn stand-in: per-pixel net on (x, x_ref)            # TODO(synk): real ScaleSpaceFlow
    ctx = jnp.tanh(
        jnp.dot(wcx_ref[...], x, preferred_element_type=jnp.float32)
        + jnp.dot(wcr_ref[...], xr, preferred_element_type=jnp.float32)
        + bc_ref[...])

    # denoise_fn stand-in: per-pixel MLP on (x_t, ctx) with time conditioning   # TODO(synk): Unet
    beff = b1_ref[...] + tn * w1t_ref[...]        # (G*HIDDEN, 1) per-sample time-conditioned bias
    h = (jnp.dot(w1x_ref[...], xt, preferred_element_type=jnp.float32)
         + jnp.dot(w1c_ref[...], ctx, preferred_element_type=jnp.float32)
         + beff)
    h = jnp.maximum(h, 0.0)
    pred_noise = (jnp.dot(w2_ref[...], h, preferred_element_type=jnp.float32)
                  + b2_ref[...])

    # pred_mode='noise': predict_start_from_noise with precomputed reciprocal scalars
    x0_pred = sr * xt - srm1 * pred_noise

    # Per-tile partial sums, reduced over sublanes -> lane-dense (1, TILE) outputs.
    out_noise_ref[...] = jnp.sum((pred_noise - nz) ** 2, axis=0, keepdims=True)
    out_aux_ref[...] = jnp.sum((x0_pred - x) ** 2, axis=0, keepdims=True)


def diffusion_wrapper_forward(x_nchw, params, key):
    """DiffusionWrapper.forward: x_ref ~ N(0,1), diffusion training forward -> scalar loss."""
    n, c, h, w = x_nchw.shape
    assert c == IMG_CH
    hw = h * w
    g, tile = _pick_packing(hw)
    lanes = hw // g
    tiles_per_sample = lanes // tile
    gc, gctx, gh = g * IMG_CH, g * CTX_CH, g * HIDDEN

    k_t, k_xref, k_noise = jax.random.split(key, 3)
    t = jax.random.randint(k_t, (n,), 0, NUM_TIMESTEPS)

    # Linear variance schedule with the standard 1000/T scaling; cumprod in log-space + floor so
    # sqrt(acp[t]) never hits 0 (the unscaled schedule underflows f32 and NaNs at large t).
    # TODO(synk): exact var_schedule='linear' implementation not provided.
    scale = 1000.0 / NUM_TIMESTEPS
    betas = jnp.linspace(scale * 1e-4, scale * 0.02, NUM_TIMESTEPS, dtype=jnp.float32)
    log_acp = jnp.cumsum(jnp.log1p(-betas))
    acp_t = jnp.maximum(jnp.exp(log_acp), ACP_FLOOR)[t]
    sa = jnp.sqrt(acp_t)
    sb = jnp.sqrt(1.0 - acp_t)
    sr = 1.0 / jnp.sqrt(acp_t)
    srm1 = jnp.sqrt(1.0 / acp_t - 1.0)
    tn = t.astype(jnp.float32) / NUM_TIMESTEPS
    sched = jnp.stack([sa, sb, sr, srm1, tn], axis=0)          # (5, N) -> SMEM scalar prefetch

    # Sublane-dense packing: (N,C,H,W) -> (N, G*C, HW/G); pixel group on sublanes, pixels on lanes.
    x_pix = (x_nchw.astype(jnp.float32).reshape(n, c, g, lanes)
             .transpose(0, 2, 1, 3).reshape(n, gc, lanes))
    # x_ref = randn_like(x) and the diffusion noise, drawn in the wrapper (bf16 in HBM).
    xr = jax.random.normal(k_xref, (n, gc, lanes), dtype=jnp.float32).astype(jnp.bfloat16)
    nz = jax.random.normal(k_noise, (n, gc, lanes), dtype=jnp.float32).astype(jnp.bfloat16)

    # Block-diagonal weight expansion so the same per-pixel math applies to G packed pixel groups.
    (wca, wcb, bc, w1a, w1b, w1c, b1, w2, b2) = params
    eye_g = jnp.eye(g, dtype=jnp.float32)
    bd = lambda wsmall: jnp.kron(eye_g, wsmall)
    col = lambda bsmall: jnp.tile(bsmall, (g, 1))
    wcx, wcr, bcb = bd(wca), bd(wcb), col(bc)                  # (GCTX, GC), (GCTX, GC), (GCTX, 1)
    w1x, w1cc, w1t, b1b = bd(w1a), bd(w1b), col(w1c), col(b1)  # (GH, GC), (GH, GCTX), (GH,1),(GH,1)
    w2b, b2b = bd(w2), col(b2)                                 # (GC, GH), (GC, 1)

    x_spec = pl.BlockSpec((None, gc, tile), lambda ni, j, *_: (ni, 0, j))
    out_spec = pl.BlockSpec((None, None, 1, tile), lambda ni, j, *_: (ni, j, 0, 0))
    wspec = lambda arr: pl.BlockSpec(arr.shape, lambda ni, j, *_: (0, 0))

    out_noise, out_aux = pl.pallas_call(
        _diffusion_kernel,
        out_shape=(jax.ShapeDtypeStruct((n, tiles_per_sample, 1, tile), jnp.float32),
                   jax.ShapeDtypeStruct((n, tiles_per_sample, 1, tile), jnp.float32)),
        grid_spec=pltpu.PrefetchScalarGridSpec(
            num_scalar_prefetch=1,
            grid=(n, tiles_per_sample),
            in_specs=[
                x_spec, x_spec, x_spec,
                wspec(wcx), wspec(wcr), wspec(bcb),
                wspec(w1x), wspec(w1cc), wspec(w1t), wspec(b1b),
                wspec(w2b), wspec(b2b),
            ],
            out_specs=[out_spec, out_spec],
        ),
        compiler_params=pltpu.CompilerParams(
            dimension_semantics=("parallel", "parallel")),
    )(sched, x_pix, xr, nz, wcx, wcr, bcb, w1x, w1cc, w1t, b1b, w2b, b2b)

    numel = jnp.float32(n * c * hw)
    noise_loss = jnp.sum(out_noise) / numel        # loss_type='l2' (mean)
    aux_loss = jnp.sum(out_aux) / numel            # aux_loss_type='l2'
    return noise_loss + AUX_LOSS_WEIGHT * aux_loss


def init_params(key):
    """Stand-in per-pixel weights, stored transposed for the W @ X (channels-on-sublanes) layout."""
    ks = jax.random.split(key, 9)
    s = 0.1
    wca = s * jax.random.normal(ks[0], (CTX_CH, IMG_CH), jnp.float32)
    wcb = s * jax.random.normal(ks[1], (CTX_CH, IMG_CH), jnp.float32)
    bc = s * jax.random.normal(ks[2], (CTX_CH, 1), jnp.float32)
    w1a = s * jax.random.normal(ks[3], (HIDDEN, IMG_CH), jnp.float32)
    w1b = s * jax.random.normal(ks[4], (HIDDEN, CTX_CH), jnp.float32)
    w1c = s * jax.random.normal(ks[5], (HIDDEN, 1), jnp.float32)
    b1 = s * jax.random.normal(ks[6], (HIDDEN, 1), jnp.float32)
    w2 = s * jax.random.normal(ks[7], (IMG_CH, HIDDEN), jnp.float32)
    b2 = s * jax.random.normal(ks[8], (IMG_CH, 1), jnp.float32)
    return (wca, wcb, bc, w1a, w1b, w1c, b1, w2, b2)


if __name__ == "__main__":
    key = jax.random.PRNGKey(0)
    k_params, k_x, k_fwd = jax.random.split(key, 3)

    # Small shapes consistent with the module: batch=2, channels=3, spatial=16x16.
    x = jax.random.normal(k_x, (2, 3, 16, 16), dtype=jnp.float32)
    params = init_params(k_params)

    loss = diffusion_wrapper_forward(x, params, k_fwd)
    loss = jax.block_until_ready(loss)
    assert loss.shape == () and bool(jnp.isfinite(loss))
    print("KERNEL_OK")
</pallas_src>

<mosaic_0001>
module attributes {stable_mosaic.version = 11 : i64} {
  func.func @_diffusion_kernel(%arg0: i32, %arg1: i32, %arg2: memref<5x2xf32, #tpu.memory_space<smem>>, %arg3: memref<1x6x128xf32, #tpu.memory_space<vmem>>, %arg4: memref<1x6x128xbf16, #tpu.memory_space<vmem>>, %arg5: memref<1x6x128xbf16, #tpu.memory_space<vmem>>, %arg6: memref<6x6xf32, #tpu.memory_space<vmem>>, %arg7: memref<6x6xf32, #tpu.memory_space<vmem>>, %arg8: memref<6x1xf32, #tpu.memory_space<vmem>>, %arg9: memref<64x6xf32, #tpu.memory_space<vmem>>, %arg10: memref<64x6xf32, #tpu.memory_space<vmem>>, %arg11: memref<64x1xf32, #tpu.memory_space<vmem>>, %arg12: memref<64x1xf32, #tpu.memory_space<vmem>>, %arg13: memref<6x64xf32, #tpu.memory_space<vmem>>, %arg14: memref<6x1xf32, #tpu.memory_space<vmem>>, %arg15: memref<1x1x1x128xf32, #tpu.memory_space<vmem>>, %arg16: memref<1x1x1x128xf32, #tpu.memory_space<vmem>>) attributes {dimension_semantics = [#tpu.dimension_semantics<parallel>, #tpu.dimension_semantics<parallel>], iteration_bounds = array<i64: 2, 1>, scalar_prefetch = 1 : i64, scratch_operands = 0 : i64, tpu.core_type = #tpu.core_type<tc>, window_params = [{transform_indices = @transform_0, window_bounds = array<i64: 1, 6, 128>}, {transform_indices = @transform_1, window_bounds = array<i64: 1, 6, 128>}, {transform_indices = @transform_2, window_bounds = array<i64: 1, 6, 128>}, {pipeline_mode = #tpu.pipeline_mode<synchronous>, transform_indices = @transform_3, window_bounds = array<i64: 6, 6>}, {pipeline_mode = #tpu.pipeline_mode<synchronous>, transform_indices = @transform_4, window_bounds = array<i64: 6, 6>}, {pipeline_mode = #tpu.pipeline_mode<synchronous>, transform_indices = @transform_5, window_bounds = array<i64: 6, 1>}, {pipeline_mode = #tpu.pipeline_mode<synchronous>, transform_indices = @transform_6, window_bounds = array<i64: 64, 6>}, {pipeline_mode = #tpu.pipeline_mode<synchronous>, transform_indices = @transform_7, window_bounds = array<i64: 64, 6>}, {pipeline_mode = #tpu.pipeline_mode<synchronous>, transform_indices = @transform_8, window_bounds = array<i64: 64, 1>}, {pipeline_mode = #tpu.pipeline_mode<synchronous>, transform_indices = @transform_9, window_bounds = array<i64: 64, 1>}, {pipeline_mode = #tpu.pipeline_mode<synchronous>, transform_indices = @transform_10, window_bounds = array<i64: 6, 64>}, {pipeline_mode = #tpu.pipeline_mode<synchronous>, transform_indices = @transform_11, window_bounds = array<i64: 6, 1>}, {transform_indices = @transform_12, window_bounds = array<i64: 1, 1, 1, 128>}, {transform_indices = @transform_13, window_bounds = array<i64: 1, 1, 1, 128>}]} {
    %c0 = arith.constant 0 : index
    %0 = arith.index_cast %arg0 : i32 to index
    %1 = memref.load %arg2[%c0, %0] : memref<5x2xf32, #tpu.memory_space<smem>>
    %c1 = arith.constant 1 : index
    %2 = arith.index_cast %arg0 : i32 to index
    %3 = memref.load %arg2[%c1, %2] : memref<5x2xf32, #tpu.memory_space<smem>>
    %c2 = arith.constant 2 : index
    %4 = arith.index_cast %arg0 : i32 to index
    %5 = memref.load %arg2[%c2, %4] : memref<5x2xf32, #tpu.memory_space<smem>>
    %c3 = arith.constant 3 : index
    %6 = arith.index_cast %arg0 : i32 to index
    %7 = memref.load %arg2[%c3, %6] : memref<5x2xf32, #tpu.memory_space<smem>>
    %c4 = arith.constant 4 : index
    %8 = arith.index_cast %arg0 : i32 to index
    %9 = memref.load %arg2[%c4, %8] : memref<5x2xf32, #tpu.memory_space<smem>>
    %c0_0 = arith.constant 0 : index
    %c0_1 = arith.constant 0 : index
    %c0_2 = arith.constant 0 : index
    %10 = vector.load %arg3[%c0_0, %c0_1, %c0_2] : memref<1x6x128xf32, #tpu.memory_space<vmem>>, vector<1x6x128xf32>
    %11 = vector.shape_cast %10 : vector<1x6x128xf32> to vector<6x128xf32>
    %c0_3 = arith.constant 0 : index
    %c0_4 = arith.constant 0 : index
    %c0_5 = arith.constant 0 : index
    %12 = vector.load %arg4[%c0_3, %c0_4, %c0_5] : memref<1x6x128xbf16, #tpu.memory_space<vmem>>, vector<1x6x128xbf16>
    %13 = vector.shape_cast %12 : vector<1x6x128xbf16> to vector<6x128xbf16>
    %14 = arith.extf %13 : vector<6x128xbf16> to vector<6x128xf32>
    %c0_6 = arith.constant 0 : index
    %c0_7 = arith.constant 0 : index
    %c0_8 = arith.constant 0 : index
    %15 = vector.load %arg5[%c0_6, %c0_7, %c0_8] : memref<1x6x128xbf16, #tpu.memory_space<vmem>>, vector<1x6x128xbf16>
    %16 = vector.shape_cast %15 : vector<1x6x128xbf16> to vector<6x128xbf16>
    %17 = arith.extf %16 : vector<6x128xbf16> to vector<6x128xf32>
    %18 = vector.broadcast %1 : f32 to vector<6x128xf32>
    %19 = arith.mulf %18, %11 : vector<6x128xf32>
    %20 = vector.broadcast %3 : f32 to vector<6x128xf32>
    %21 = arith.mulf %20, %17 : vector<6x128xf32>
    %22 = arith.addf %19, %21 : vector<6x128xf32>
    %c0_9 = arith.constant 0 : index
    %c0_10 = arith.constant 0 : index
    %23 = vector.load %arg6[%c0_9, %c0_10] : memref<6x6xf32, #tpu.memory_space<vmem>>, vector<6x6xf32>
    %cst = arith.constant dense<0.000000e+00> : vector<6x128xf32>
    %24 = tpu.matmul %23, %11, %cst {dimension_numbers = #tpu.dot_dimension_numbers<[1], [0], [0], [1], [0, 0, 1, 1], [], []>} : vector<6x6xf32>, vector<6x128xf32>, vector<6x128xf32> -> vector<6x128xf32>
    %c0_11 = arith.constant 0 : index
    %c0_12 = arith.constant 0 : index
    %25 = vector.load %arg7[%c0_11, %c0_12] : memref<6x6xf32, #tpu.memory_space<vmem>>, vector<6x6xf32>
    %cst_13 = arith.constant dense<0.000000e+00> : vector<6x128xf32>
    %26 = tpu.matmul %25, %14, %cst_13 {dimension_numbers = #tpu.dot_dimension_numbers<[1], [0], [0], [1], [0, 0, 1, 1], [], []>} : vector<6x6xf32>, vector<6x128xf32>, vector<6x128xf32> -> vector<6x128xf32>
    %27 = arith.addf %24, %26 : vector<6x128xf32>
    %c0_14 = arith.constant 0 : index
    %c0_15 = arith.constant 0 : index
    %28 = vector.load %arg8[%c0_14, %c0_15] : memref<6x1xf32, #tpu.memory_space<vmem>>, vector<6x1xf32>
    %29 = vector.broadcast %28 : vector<6x1xf32> to vector<6x128xf32>
    %30 = arith.addf %27, %29 : vector<6x128xf32>
    %31 = math.tanh %30 : vector<6x128xf32>
    %c0_16 = arith.constant 0 : index
    %c0_17 = arith.constant 0 : index
    %32 = vector.load %arg12[%c0_16, %c0_17] : memref<64x1xf32, #tpu.memory_space<vmem>>, vector<64x1xf32>
    %c0_18 = arith.constant 0 : index
    %c0_19 = arith.constant 0 : index
    %33 = vector.load %arg11[%c0_18, %c0_19] : memref<64x1xf32, #tpu.memory_space<vmem>>, vector<64x1xf32>
    %34 = vector.broadcast %9 : f32 to vector<64x1xf32>
    %35 = arith.mulf %34, %33 : vector<64x1xf32>
    %36 = arith.addf %32, %35 : vector<64x1xf32>
    %c0_20 = arith.constant 0 : index
    %c0_21 = arith.constant 0 : index
    %37 = vector.load %arg9[%c0_20, %c0_21] : memref<64x6xf32, #tpu.memory_space<vmem>>, vector<64x6xf32>
    %cst_22 = arith.constant dense<0.000000e+00> : vector<64x128xf32>
    %38 = tpu.matmul %37, %22, %cst_22 {dimension_numbers = #tpu.dot_dimension_numbers<[1], [0], [0], [1], [0, 0, 1, 1], [], []>} : vector<64x6xf32>, vector<6x128xf32>, vector<64x128xf32> -> vector<64x128xf32>
    %c0_23 = arith.constant 0 : index
    %c0_24 = arith.constant 0 : index
    %39 = vector.load %arg10[%c0_23, %c0_24] : memref<64x6xf32, #tpu.memory_space<vmem>>, vector<64x6xf32>
    %cst_25 = arith.constant dense<0.000000e+00> : vector<64x128xf32>
    %40 = tpu.matmul %39, %31, %cst_25 {dimension_numbers = #tpu.dot_dimension_numbers<[1], [0], [0], [1], [0, 0, 1, 1], [], []>} : vector<64x6xf32>, vector<6x128xf32>, vector<64x128xf32> -> vector<64x128xf32>
    %41 = arith.addf %38, %40 : vector<64x128xf32>
    %42 = vector.broadcast %36 : vector<64x1xf32> to vector<64x128xf32>
    %43 = arith.addf %41, %42 : vector<64x128xf32>
    %cst_26 = arith.constant 0.000000e+00 : f32
    %44 = vector.broadcast %cst_26 : f32 to vector<64x128xf32>
    %45 = arith.maximumf %43, %44 : vector<64x128xf32>
    %c0_27 = arith.constant 0 : index
    %c0_28 = arith.constant 0 : index
    %46 = vector.load %arg13[%c0_27, %c0_28] : memref<6x64xf32, #tpu.memory_space<vmem>>, vector<6x64xf32>
    %cst_29 = arith.constant dense<0.000000e+00> : vector<6x128xf32>
    %47 = tpu.matmul %46, %45, %cst_29 {dimension_numbers = #tpu.dot_dimension_numbers<[1], [0], [0], [1], [0, 0, 1, 1], [], []>} : vector<6x64xf32>, vector<64x128xf32>, vector<6x128xf32> -> vector<6x128xf32>
    %c0_30 = arith.constant 0 : index
    %c0_31 = arith.constant 0 : index
    %48 = vector.load %arg14[%c0_30, %c0_31] : memref<6x1xf32, #tpu.memory_space<vmem>>, vector<6x1xf32>
    %49 = vector.broadcast %48 : vector<6x1xf32> to vector<6x128xf32>
    %50 = arith.addf %47, %49 : vector<6x128xf32>
    %51 = vector.broadcast %5 : f32 to vector<6x128xf32>
    %52 = arith.mulf %51, %22 : vector<6x128xf32>
    %53 = vector.broadcast %7 : f32 to vector<6x128xf32>
    %54 = arith.mulf %53, %50 : vector<6x128xf32>
    %55 = arith.subf %52, %54 : vector<6x128xf32>
    %56 = arith.subf %50, %17 : vector<6x128xf32>
    %57 = arith.mulf %56, %56 : vector<6x128xf32>
    %cst_32 = arith.constant dense<0.000000e+00> : vector<128xf32>
    %58 = vector.multi_reduction <add>, %57, %cst_32 [0] : vector<6x128xf32> to vector<128xf32>
    %59 = vector.shape_cast %58 : vector<128xf32> to vector<1x128xf32>
    %c0_33 = arith.constant 0 : index
    %c0_34 = arith.constant 0 : index
    %c0_35 = arith.constant 0 : index
    %c0_36 = arith.constant 0 : index
    %60 = vector.load %arg15[%c0_33, %c0_34, %c0_35, %c0_36] : memref<1x1x1x128xf32, #tpu.memory_space<vmem>>, vector<1x1x1x128xf32>
    %61 = vector.shape_cast %60 : vector<1x1x1x128xf32> to vector<1x128xf32>
    %62 = vector.shape_cast %59 : vector<1x128xf32> to vector<1x1x1x128xf32>
    tpu.vector_store %arg15[%c0_33, %c0_34, %c0_35, %c0_36], %62 {strides = array<i32>} : memref<1x1x1x128xf32, #tpu.memory_space<vmem>>, vector<1x1x1x128xf32>,
    %63 = arith.subf %55, %11 : vector<6x128xf32>
    %64 = arith.mulf %63, %63 : vector<6x128xf32>
    %cst_37 = arith.constant dense<0.000000e+00> : vector<128xf32>
    %65 = vector.multi_reduction <add>, %64, %cst_37 [0] : vector<6x128xf32> to vector<128xf32>
    %66 = vector.shape_cast %65 : vector<128xf32> to vector<1x128xf32>
    %c0_38 = arith.constant 0 : index
    %c0_39 = arith.constant 0 : index
    %c0_40 = arith.constant 0 : index
    %c0_41 = arith.constant 0 : index
    %67 = vector.load %arg16[%c0_38, %c0_39, %c0_40, %c0_41] : memref<1x1x1x128xf32, #tpu.memory_space<vmem>>, vector<1x1x1x128xf32>
    %68 = vector.shape_cast %67 : vector<1x1x1x128xf32> to vector<1x128xf32>
    %69 = vector.shape_cast %66 : vector<1x128xf32> to vector<1x1x1x128xf32>
    tpu.vector_store %arg16[%c0_38, %c0_39, %c0_40, %c0_41], %69 {strides = array<i32>} : memref<1x1x1x128xf32, #tpu.memory_space<vmem>>, vector<1x1x1x128xf32>,
    return
  }
  func.func @transform_0(%arg0: i32, %arg1: i32, %arg2: memref<5x2xf32, #tpu.memory_space<smem>>) -> (i32, i32, i32) {
    %c0_i32 = arith.constant 0 : i32
    %c0_i32_0 = arith.constant 0 : i32
    return %arg0, %c0_i32, %arg1 : i32, i32, i32
  }
  func.func @transform_1(%arg0: i32, %arg1: i32, %arg2: memref<5x2xf32, #tpu.memory_space<smem>>) -> (i32, i32, i32) {
    %c0_i32 = arith.constant 0 : i32
    %c0_i32_0 = arith.constant 0 : i32
    return %arg0, %c0_i32, %arg1 : i32, i32, i32
  }
  func.func @transform_2(%arg0: i32, %arg1: i32, %arg2: memref<5x2xf32, #tpu.memory_space<smem>>) -> (i32, i32, i32) {
    %c0_i32 = arith.constant 0 : i32
    %c0_i32_0 = arith.constant 0 : i32
    return %arg0, %c0_i32, %arg1 : i32, i32, i32
  }
  func.func @transform_3(%arg0: i32, %arg1: i32, %arg2: memref<5x2xf32, #tpu.memory_space<smem>>) -> (i32, i32) {
    %c0_i32 = arith.constant 0 : i32
    %c0_i32_0 = arith.constant 0 : i32
    %c0_i32_1 = arith.constant 0 : i32
    return %c0_i32, %c0_i32_0 : i32, i32
  }
  func.func @transform_4(%arg0: i32, %arg1: i32, %arg2: memref<5x2xf32, #tpu.memory_space<smem>>) -> (i32, i32) {
    %c0_i32 = arith.constant 0 : i32
    %c0_i32_0 = arith.constant 0 : i32
    %c0_i32_1 = arith.constant 0 : i32
    return %c0_i32, %c0_i32_0 : i32, i32
  }
  func.func @transform_5(%arg0: i32, %arg1: i32, %arg2: memref<5x2xf32, #tpu.memory_space<smem>>) -> (i32, i32) {
    %c0_i32 = arith.constant 0 : i32
    %c0_i32_0 = arith.constant 0 : i32
    %c0_i32_1 = arith.constant 0 : i32
    return %c0_i32, %c0_i32_0 : i32, i32
  }
  func.func @transform_6(%arg0: i32, %arg1: i32, %arg2: memref<5x2xf32, #tpu.memory_space<smem>>) -> (i32, i32) {
    %c0_i32 = arith.constant 0 : i32
    %c0_i32_0 = arith.constant 0 : i32
    %c0_i32_1 = arith.constant 0 : i32
    return %c0_i32, %c0_i32_0 : i32, i32
  }
  func.func @transform_7(%arg0: i32, %arg1: i32, %arg2: memref<5x2xf32, #tpu.memory_space<smem>>) -> (i32, i32) {
    %c0_i32 = arith.constant 0 : i32
    %c0_i32_0 = arith.constant 0 : i32
    %c0_i32_1 = arith.constant 0 : i32
    return %c0_i32, %c0_i32_0 : i32, i32
  }
  func.func @transform_8(%arg0: i32, %arg1: i32, %arg2: memref<5x2xf32, #tpu.memory_space<smem>>) -> (i32, i32) {
    %c0_i32 = arith.constant 0 : i32
    %c0_i32_0 = arith.constant 0 : i32
    %c0_i32_1 = arith.constant 0 : i32
    return %c0_i32, %c0_i32_0 : i32, i32
  }
  func.func @transform_9(%arg0: i32, %arg1: i32, %arg2: memref<5x2xf32, #tpu.memory_space<smem>>) -> (i32, i32) {
    %c0_i32 = arith.constant 0 : i32
    %c0_i32_0 = arith.constant 0 : i32
    %c0_i32_1 = arith.constant 0 : i32
    return %c0_i32, %c0_i32_0 : i32, i32
  }
  func.func @transform_10(%arg0: i32, %arg1: i32, %arg2: memref<5x2xf32, #tpu.memory_space<smem>>) -> (i32, i32) {
    %c0_i32 = arith.constant 0 : i32
    %c0_i32_0 = arith.constant 0 : i32
    %c0_i32_1 = arith.constant 0 : i32
    return %c0_i32, %c0_i32_0 : i32, i32
  }
  func.func @transform_11(%arg0: i32, %arg1: i32, %arg2: memref<5x2xf32, #tpu.memory_space<smem>>) -> (i32, i32) {
    %c0_i32 = arith.constant 0 : i32
    %c0_i32_0 = arith.constant 0 : i32
    %c0_i32_1 = arith.constant 0 : i32
    return %c0_i32, %c0_i32_0 : i32, i32
  }
  func.func @transform_12(%arg0: i32, %arg1: i32, %arg2: memref<5x2xf32, #tpu.memory_space<smem>>) -> (i32, i32, i32, i32) {
    %c0_i32 = arith.constant 0 : i32
    %c0_i32_0 = arith.constant 0 : i32
    %c0_i32_1 = arith.constant 0 : i32
    return %arg0, %arg1, %c0_i32, %c0_i32_0 : i32, i32, i32, i32
  }
  func.func @transform_13(%arg0: i32, %arg1: i32, %arg2: memref<5x2xf32, #tpu.memory_space<smem>>) -> (i32, i32, i32, i32) {
    %c0_i32 = arith.constant 0 : i32
    %c0_i32_0 = arith.constant 0 : i32
    %c0_i32_1 = arith.constant 0 : i32
    return %arg0, %arg1, %c0_i32, %c0_i32_0 : i32, i32, i32, i32
  }
}

</mosaic_0001>

<llo_original>
// kernel: tpu_custom_call.1
$region0: #{tpu_custom_call.1}
  #allocation0 [shape = 'u32[]', space=smem, size = 0x4, offset = 0x4, fixed_abs, tag = 'smem constant byte address 0x4 - core index']
  #allocation1 [shape = 'u32[72,128]{1,0:T(1,128)}', space=vmem, size = 0x9000, scoped, tag = 'internal scratch']
  #allocation2 [shape = 's32[1]{0}', space=sflag, size = 0x4, scoped, tag = 'scoped memory for tpu_custom_call.1']
  #allocation3 [shape = 'u8[4096]{0}', space=smem, size = 0x1000, scoped, tag = 'prefetched SMEM operand 0']
  %s0 = inlined_call_operand.vmem [shape: f32[5,2], index: 0, kind: input, shape index: {}]
  %s1 = inlined_call_operand.vmem [shape: f32[2,6,128], index: 1, kind: input, shape index: {}]
  %s2 = inlined_call_operand.vmem [shape: bf16[2,6,128], index: 2, kind: input, shape index: {}]
  %s3 = inlined_call_operand.vmem [shape: bf16[2,6,128], index: 3, kind: input, shape index: {}]
  %s4 = inlined_call_operand.vmem [shape: f32[6,6], index: 4, kind: input, shape index: {}]
  %s5 = inlined_call_operand.vmem [shape: f32[6,6], index: 5, kind: input, shape index: {}]
  %s6 = inlined_call_operand.vmem [shape: f32[6,1], index: 6, kind: input, shape index: {}]
  %s7 = inlined_call_operand.vmem [shape: f32[64,6], index: 7, kind: input, shape index: {}]
  %s8 = inlined_call_operand.vmem [shape: f32[64,6], index: 8, kind: input, shape index: {}]
  %s9 = inlined_call_operand.vmem [shape: f32[64,1], index: 9, kind: input, shape index: {}]
  %s10 = inlined_call_operand.vmem [shape: f32[64,1], index: 10, kind: input, shape index: {}]
  %s11 = inlined_call_operand.vmem [shape: f32[6,64], index: 11, kind: input, shape index: {}]
  %s12 = inlined_call_operand.vmem [shape: f32[6,1], index: 12, kind: input, shape index: {}]
  %s13 = inlined_call_operand.hbm [shape: f32[2,1,1,128], index: 13, kind: output, shape index: {0}]
  %s14 = inlined_call_operand.hbm [shape: f32[2,1,1,128], index: 14, kind: output, shape index: {1}]
  %15 = xla_tuple %s13, %s14
  %s16 = sld [smem:[#allocation0]]
  $region89: #{tpu_custom_call.1} parent=0
    _
  %s18 = ssub.s32 1, %s16
  %s19 = scalar_select 0, %s18, %s16
  %s21 = sshll.u32 %s0, 4
  %s22 = int_to_ptr.vmem [resolvable:$true] %s21
  %24 = dma.vmem_to_smem %s22, 128, [#allocation3], [#allocation2]
  %26 = dma.done [#allocation2], 128
  %27 = sfence
  $region1: #{tpu_custom_call.1} parent=0
    #allocation4 [shape = 'u8[1024]{0}', space=vmem, size = 0x400, scoped, tag = 'output window, operand 0']
    #allocation5 [shape = 's32[2]{0}', space=sflag, size = 0x8, scoped, tag = 'scoped memory for tpu_custom_call.1']
    #allocation6 [shape = 'u8[1024]{0}', space=vmem, size = 0x400, scoped, tag = 'output window, operand 1']
    #allocation7 [shape = 's32[2]{0}', space=sflag, size = 0x8, scoped, tag = 'scoped memory for tpu_custom_call.1']
    %28 = vsyncpa [#allocation5], 0
    %s29 = scalar_lea.sflag [#allocation5], 1
    %30 = vsyncpa %s29, 0
    %31 = vsyncpa [#allocation7], 0
    %s32 = scalar_lea.sflag [#allocation7], 1
    %33 = vsyncpa %s32, 0
    loop: start=0, step=1, limit=4
    $region2: #{tpu_custom_call.1} parent=1 // loop_pre_header
      _
    $region3: #{tpu_custom_call.1} parent=1 // loop_header
      %s35 = sphi 0, %s39
      %p36 = scmp.ge.s32.totalorder %s35, 4
      %s42 = sphi 0, %s54
      %s43 = sphi 0, %s50
      %s44 = sphi 0, %s42
      %s45 = sphi 0, %s43
      %s46 = sphi 0, %s44
      %s47 = sphi 0, %s45
      %s59 = sphi 0, %s61
      %s62 = sphi 0, %s59
      %s63 = sphi 0, %s62
      %s79 = sphi 0, %s63
      %s87 = sphi 0, %s89
      %s90 = sphi 0, %s87
      %s91 = sphi 0, %s90
      %s107 = sphi 0, %s91
      %s115 = sphi 0, %s117
      %s118 = sphi 0, %s115
      %s119 = sphi 0, %s118
      %s135 = sphi 0, %s119
      %s139 = sphi 0, %s139
      %s141 = sphi 0, %s139
      %s142 = sphi 0, %s141
      %s156 = sphi 0, %s142
      %s160 = sphi 0, %s160
      %s162 = sphi 0, %s160
      %s163 = sphi 0, %s162
      %s177 = sphi 0, %s163
      %s181 = sphi 0, %s181
      %s183 = sphi 0, %s181
      %s184 = sphi 0, %s183
      %s198 = sphi 0, %s184
      %s202 = sphi 0, %s202
      %s204 = sphi 0, %s202
      %s205 = sphi 0, %s204
      %s219 = sphi 0, %s205
      %s223 = sphi 0, %s223
      %s225 = sphi 0, %s223
      %s226 = sphi 0, %s225
      %s240 = sphi 0, %s226
      %s244 = sphi 0, %s244
      %s246 = sphi 0, %s244
      %s247 = sphi 0, %s246
      %s261 = sphi 0, %s247
      %s265 = sphi 0, %s265
      %s267 = sphi 0, %s265
      %s268 = sphi 0, %s267
      %s282 = sphi 0, %s268
      %s286 = sphi 0, %s286
      %s288 = sphi 0, %s286
      %s289 = sphi 0, %s288
      %s303 = sphi 0, %s289
      %s307 = sphi 0, %s307
      %s309 = sphi 0, %s307
      %s310 = sphi 0, %s309
      %s324 = sphi 0, %s310
      %s332 = sphi 0, %s334
      %s335 = sphi 0, %s332
      %s336 = sphi 0, %s335
      %s352 = sphi 0, %s336
      %s360 = sphi 0, %s362
      %s363 = sphi 0, %s360
      %s364 = sphi 0, %s363
      %s380 = sphi 0, %s364
    $region4: #{tpu_custom_call.1} parent=1 // loop_header_branch
      %38 = sbr.rel (%p36) target = $region8
    $region5: #{tpu_custom_call.1} parent=1 // loop_body
      %s40 = ssub.s32 %s35, 1
      %s41 = ssub.s32 %s35, 2
      %s48 = sadd.s32 1, %s43
      %p49 = scmp.ge.s32.totalorder %s48, 1
      %s50 = scalar_select %p49, 0, %s48
      %s51 = sadd.s32 1, %s42
      %s52 = scalar_select %p49, %s51, %s42
      %p53 = scmp.ge.s32.totalorder %s52, 2
      %s54 = scalar_select %p53, 0, %s52
      %s55 = ssub.s32 %s42, %s54
      %s56 = ssub.s32 %s43, %s50
      %s57 = sor.u32 %s55, %s56
      %p58 = scmp.eq.s32.totalorder %s57, 0
      %s60 = sadd.s32 %s59, 1
      %s61 = scalar_select %p58, %s59, %s60
      %p64 = pneg %p58
      %p65 = scmp.eq.s32.totalorder %s35, 1
      %p66 = por %p64, %p65
      %p67 = scmp.ne.s32.totalorder %s59, %s62
      %p68 = scmp.eq.s32.totalorder %s35, 0
      %p69 = por %p67, %p68
      %p70 = scmp.ne.s32.totalorder %s59, %s62
      %p71 = scmp.eq.s32.totalorder %s40, 1
      %p72 = por %p70, %p71
      %p73 = scmp.ne.s32.totalorder %s62, %s63
      %p74 = scmp.eq.s32.totalorder %s40, 0
      %p75 = por %p73, %p74
      %p76 = scmp.ne.s32.totalorder %s62, %s63
      %p77 = scmp.eq.s32.totalorder %s41, 1
      %p78 = por %p76, %p77
      %p80 = scmp.ne.s32.totalorder %s63, %s79
      %p81 = scmp.eq.s32.totalorder %s41, 0
      %p82 = por %p80, %p81
      %s83 = ssub.s32 %s42, %s54
      %s84 = ssub.s32 %s43, %s50
      %s85 = sor.u32 %s83, %s84
      %p86 = scmp.eq.s32.totalorder %s85, 0
      %s88 = sadd.s32 %s87, 1
      %s89 = scalar_select %p86, %s87, %s88
      %p92 = pneg %p86
      %p93 = scmp.eq.s32.totalorder %s35, 1
      %p94 = por %p92, %p93
      %p95 = scmp.ne.s32.totalorder %s87, %s90
      %p96 = scmp.eq.s32.totalorder %s35, 0
      %p97 = por %p95, %p96
      %p98 = scmp.ne.s32.totalorder %s87, %s90
      %p99 = scmp.eq.s32.totalorder %s40, 1
      %p100 = por %p98, %p99
      %p101 = scmp.ne.s32.totalorder %s90, %s91
      %p102 = scmp.eq.s32.totalorder %s40, 0
      %p103 = por %p101, %p102
      %p104 = scmp.ne.s32.totalorder %s90, %s91
      %p105 = scmp.eq.s32.totalorder %s41, 1
      %p106 = por %p104, %p105
      %p108 = scmp.ne.s32.totalorder %s91, %s107
      %p109 = scmp.eq.s32.totalorder %s41, 0
      %p110 = por %p108, %p109
      %s111 = ssub.s32 %s42, %s54
      %s112 = ssub.s32 %s43, %s50
      %s113 = sor.u32 %s111, %s112
      %p114 = scmp.eq.s32.totalorder %s113, 0
      %s116 = sadd.s32 %s115, 1
      %s117 = scalar_select %p114, %s115, %s116
      %p120 = pneg %p114
      %p121 = scmp.eq.s32.totalorder %s35, 1
      %p122 = por %p120, %p121
      %p123 = scmp.ne.s32.totalorder %s115, %s118
      %p124 = scmp.eq.s32.totalorder %s35, 0
      %p125 = por %p123, %p124
      %p126 = scmp.ne.s32.totalorder %s115, %s118
      %p127 = scmp.eq.s32.totalorder %s40, 1
      %p128 = por %p126, %p127
      %p129 = scmp.ne.s32.totalorder %s118, %s119
      %p130 = scmp.eq.s32.totalorder %s40, 0
      %p131 = por %p129, %p130
      %p132 = scmp.ne.s32.totalorder %s118, %s119
      %p133 = scmp.eq.s32.totalorder %s41, 1
      %p134 = por %p132, %p133
      %p136 = scmp.ne.s32.totalorder %s119, %s135
      %p137 = scmp.eq.s32.totalorder %s41, 0
      %p138 = por %p136, %p137
      %s140 = sadd.s32 %s139, 1
      %p143 = scmp.eq.s32.totalorder %s35, 1
      %p144 = scmp.ne.s32.totalorder %s139, %s141
      %p145 = scmp.eq.s32.totalorder %s35, 0
      %p146 = por %p144, %p145
      %p147 = scmp.ne.s32.totalorder %s139, %s141
      %p148 = scmp.eq.s32.totalorder %s40, 1
      %p149 = por %p147, %p148
      %p150 = scmp.ne.s32.totalorder %s141, %s142
      %p151 = scmp.eq.s32.totalorder %s40, 0
      %p152 = por %p150, %p151
      %p153 = scmp.ne.s32.totalorder %s141, %s142
      %p154 = scmp.eq.s32.totalorder %s41, 1
      %p155 = por %p153, %p154
      %p157 = scmp.ne.s32.totalorder %s142, %s156
      %p158 = scmp.eq.s32.totalorder %s41, 0
      %p159 = por %p157, %p158
      %s161 = sadd.s32 %s160, 1
      %p164 = scmp.eq.s32.totalorder %s35, 1
      %p165 = scmp.ne.s32.totalorder %s160, %s162
      %p166 = scmp.eq.s32.totalorder %s35, 0
      %p167 = por %p165, %p166
      %p168 = scmp.ne.s32.totalorder %s160, %s162
      %p169 = scmp.eq.s32.totalorder %s40, 1
      %p170 = por %p168, %p169
      %p171 = scmp.ne.s32.totalorder %s162, %s163
      %p172 = scmp.eq.s32.totalorder %s40, 0
      %p173 = por %p171, %p172
      %p174 = scmp.ne.s32.totalorder %s162, %s163
      %p175 = scmp.eq.s32.totalorder %s41, 1
      %p176 = por %p174, %p175
      %p178 = scmp.ne.s32.totalorder %s163, %s177
      %p179 = scmp.eq.s32.totalorder %s41, 0
      %p180 = por %p178, %p179
      %s182 = sadd.s32 %s181, 1
      %p185 = scmp.eq.s32.totalorder %s35, 1
      %p186 = scmp.ne.s32.totalorder %s181, %s183
      %p187 = scmp.eq.s32.totalorder %s35, 0
      %p188 = por %p186, %p187
      %p189 = scmp.ne.s32.totalorder %s181, %s183
      %p190 = scmp.eq.s32.totalorder %s40, 1
      %p191 = por %p189, %p190
      %p192 = scmp.ne.s32.totalorder %s183, %s184
      %p193 = scmp.eq.s32.totalorder %s40, 0
      %p194 = por %p192, %p193
      %p195 = scmp.ne.s32.totalorder %s183, %s184
      %p196 = scmp.eq.s32.totalorder %s41, 1
      %p197 = por %p195, %p196
      %p199 = scmp.ne.s32.totalorder %s184, %s198
      %p200 = scmp.eq.s32.totalorder %s41, 0
      %p201 = por %p199, %p200
      %s203 = sadd.s32 %s202, 1
      %p206 = scmp.eq.s32.totalorder %s35, 1
      %p207 = scmp.ne.s32.totalorder %s202, %s204
      %p208 = scmp.eq.s32.totalorder %s35, 0
      %p209 = por %p207, %p208
      %p210 = scmp.ne.s32.totalorder %s202, %s204
      %p211 = scmp.eq.s32.totalorder %s40, 1
      %p212 = por %p210, %p211
      %p213 = scmp.ne.s32.totalorder %s204, %s205
      %p214 = scmp.eq.s32.totalorder %s40, 0
      %p215 = por %p213, %p214
      %p216 = scmp.ne.s32.totalorder %s204, %s205
      %p217 = scmp.eq.s32.totalorder %s41, 1
      %p218 = por %p216, %p217
      %p220 = scmp.ne.s32.totalorder %s205, %s219
      %p221 = scmp.eq.s32.totalorder %s41, 0
      %p222 = por %p220, %p221
      %s224 = sadd.s32 %s223, 1
      %p227 = scmp.eq.s32.totalorder %s35, 1
      %p228 = scmp.ne.s32.totalorder %s223, %s225
      %p229 = scmp.eq.s32.totalorder %s35, 0
      %p230 = por %p228, %p229
      %p231 = scmp.ne.s32.totalorder %s223, %s225
      %p232 = scmp.eq.s32.totalorder %s40, 1
      %p233 = por %p231, %p232
      %p234 = scmp.ne.s32.totalorder %s225, %s226
      %p235 = scmp.eq.s32.totalorder %s40, 0
      %p236 = por %p234, %p235
      %p237 = scmp.ne.s32.totalorder %s225, %s226
      %p238 = scmp.eq.s32.totalorder %s41, 1
      %p239 = por %p237, %p238
      %p241 = scmp.ne.s32.totalorder %s226, %s240
      %p242 = scmp.eq.s32.totalorder %s41, 0
      %p243 = por %p241, %p242
      %s245 = sadd.s32 %s244, 1
      %p248 = scmp.eq.s32.totalorder %s35, 1
      %p249 = scmp.ne.s32.totalorder %s244, %s246
      %p250 = scmp.eq.s32.totalorder %s35, 0
      %p251 = por %p249, %p250
      %p252 = scmp.ne.s32.totalorder %s244, %s246
      %p253 = scmp.eq.s32.totalorder %s40, 1
      %p254 = por %p252, %p253
      %p255 = scmp.ne.s32.totalorder %s246, %s247
      %p256 = scmp.eq.s32.totalorder %s40, 0
      %p257 = por %p255, %p256
      %p258 = scmp.ne.s32.totalorder %s246, %s247
      %p259 = scmp.eq.s32.totalorder %s41, 1
      %p260 = por %p258, %p259
      %p262 = scmp.ne.s32.totalorder %s247, %s261
      %p263 = scmp.eq.s32.totalorder %s41, 0
      %p264 = por %p262, %p263
      %s266 = sadd.s32 %s265, 1
      %p269 = scmp.eq.s32.totalorder %s35, 1
      %p270 = scmp.ne.s32.totalorder %s265, %s267
      %p271 = scmp.eq.s32.totalorder %s35, 0
      %p272 = por %p270, %p271
      %p273 = scmp.ne.s32.totalorder %s265, %s267
      %p274 = scmp.eq.s32.totalorder %s40, 1
      %p275 = por %p273, %p274
      %p276 = scmp.ne.s32.totalorder %s267, %s268
      %p277 = scmp.eq.s32.totalorder %s40, 0
      %p278 = por %p276, %p277
      %p279 = scmp.ne.s32.totalorder %s267, %s268
      %p280 = scmp.eq.s32.totalorder %s41, 1
      %p281 = por %p279, %p280
      %p283 = scmp.ne.s32.totalorder %s268, %s282
      %p284 = scmp.eq.s32.totalorder %s41, 0
      %p285 = por %p283, %p284
      %s287 = sadd.s32 %s286, 1
      %p290 = scmp.eq.s32.totalorder %s35, 1
      %p291 = scmp.ne.s32.totalorder %s286, %s288
      %p292 = scmp.eq.s32.totalorder %s35, 0
      %p293 = por %p291, %p292
      %p294 = scmp.ne.s32.totalorder %s286, %s288
      %p295 = scmp.eq.s32.totalorder %s40, 1
      %p296 = por %p294, %p295
      %p297 = scmp.ne.s32.totalorder %s288, %s289
      %p298 = scmp.eq.s32.totalorder %s40, 0
      %p299 = por %p297, %p298
      %p300 = scmp.ne.s32.totalorder %s288, %s289
      %p301 = scmp.eq.s32.totalorder %s41, 1
      %p302 = por %p300, %p301
      %p304 = scmp.ne.s32.totalorder %s289, %s303
      %p305 = scmp.eq.s32.totalorder %s41, 0
      %p306 = por %p304, %p305
      %s308 = sadd.s32 %s307, 1
      %p311 = scmp.eq.s32.totalorder %s35, 1
      %p312 = scmp.ne.s32.totalorder %s307, %s309
      %p313 = scmp.eq.s32.totalorder %s35, 0
      %p314 = por %p312, %p313
      %p315 = scmp.ne.s32.totalorder %s307, %s309
      %p316 = scmp.eq.s32.totalorder %s40, 1
      %p317 = por %p315, %p316
      %p318 = scmp.ne.s32.totalorder %s309, %s310
      %p319 = scmp.eq.s32.totalorder %s40, 0
      %p320 = por %p318, %p319
      %p321 = scmp.ne.s32.totalorder %s309, %s310
      %p322 = scmp.eq.s32.totalorder %s41, 1
      %p323 = por %p321, %p322
      %p325 = scmp.ne.s32.totalorder %s310, %s324
      %p326 = scmp.eq.s32.totalorder %s41, 0
      %p327 = por %p325, %p326
      %s328 = ssub.s32 %s42, %s54
      %s329 = ssub.s32 %s43, %s50
      %s330 = sor.u32 %s328, %s329
      %p331 = scmp.eq.s32.totalorder %s330, 0
      %s333 = sadd.s32 %s332, 1
      %s334 = scalar_select %p331, %s332, %s333
      %p337 = pneg %p331
      %p338 = scmp.eq.s32.totalorder %s35, 1
      %p339 = por %p337, %p338
      %p340 = scmp.ne.s32.totalorder %s332, %s335
      %p341 = scmp.eq.s32.totalorder %s35, 0
      %p342 = por %p340, %p341
      %p343 = scmp.ne.s32.totalorder %s332, %s335
      %p344 = scmp.eq.s32.totalorder %s40, 1
      %p345 = por %p343, %p344
      %p346 = scmp.ne.s32.totalorder %s335, %s336
      %p347 = scmp.eq.s32.totalorder %s40, 0
      %p348 = por %p346, %p347
      %p349 = scmp.ne.s32.totalorder %s335, %s336
      %p350 = scmp.eq.s32.totalorder %s41, 1
      %p351 = por %p349, %p350
      %p353 = scmp.ne.s32.totalorder %s336, %s352
      %p354 = scmp.eq.s32.totalorder %s41, 0
      %p355 = por %p353, %p354
      %s356 = ssub.s32 %s42, %s54
      %s357 = ssub.s32 %s43, %s50
      %s358 = sor.u32 %s356, %s357
      %p359 = scmp.eq.s32.totalorder %s358, 0
      %s361 = sadd.s32 %s360, 1
      %s362 = scalar_select %p359, %s360, %s361
      %p365 = pneg %p359
      %p366 = scmp.eq.s32.totalorder %s35, 1
      %p367 = por %p365, %p366
      %p368 = scmp.ne.s32.totalorder %s360, %s363
      %p369 = scmp.eq.s32.totalorder %s35, 0
      %p370 = por %p368, %p369
      %p371 = scmp.ne.s32.totalorder %s360, %s363
      %p372 = scmp.eq.s32.totalorder %s40, 1
      %p373 = por %p371, %p372
      %p374 = scmp.ne.s32.totalorder %s363, %s364
      %p375 = scmp.eq.s32.totalorder %s40, 0
      %p376 = por %p374, %p375
      %p377 = scmp.ne.s32.totalorder %s363, %s364
      %p378 = scmp.eq.s32.totalorder %s41, 1
      %p379 = por %p377, %p378
      %p381 = scmp.ne.s32.totalorder %s364, %s380
      %p382 = scmp.eq.s32.totalorder %s41, 0
      %p383 = por %p381, %p382
      %p384 = scmp.le.s32.totalorder 1, %s35
      %p385 = scmp.lt.s32.totalorder %s35, 3
      %p386 = pnand %p384, %p385
      %p387 = pneg %p386
      // Predicated region
      $region9: #{tpu_custom_call.1} parent=5 // pred_check
        _
      $region10: #{tpu_custom_call.1} parent=5 // pred_check_branch
        %389 = sbr.rel (%p386) target = $region12
      $region11: #{tpu_custom_call.1} parent=5 // pred_region
        %s390 = ssub.s32 %s35, 1
        // Predicated region
        $region13: #{tpu_custom_call.1} parent=11 // pred_check
          %p391 = pneg %p152
        $region14: #{tpu_custom_call.1} parent=11 // pred_check_branch
          %393 = sbr.rel (%p391) target = $region16
        $region15: #{tpu_custom_call.1} parent=11 // pred_region
          _
        $region16: #{tpu_custom_call.1} parent=11 // pred_fallthru
          _
        // Predicated region
        $region17: #{tpu_custom_call.1} parent=11 // pred_check
          %p394 = pneg %p173
        $region18: #{tpu_custom_call.1} parent=11 // pred_check_branch
          %396 = sbr.rel (%p394) target = $region20
        $region19: #{tpu_custom_call.1} parent=11 // pred_region
          _
        $region20: #{tpu_custom_call.1} parent=11 // pred_fallthru
          _
        // Predicated region
        $region21: #{tpu_custom_call.1} parent=11 // pred_check
          %p397 = pneg %p194
        $region22: #{tpu_custom_call.1} parent=11 // pred_check_branch
          %399 = sbr.rel (%p397) target = $region24
        $region23: #{tpu_custom_call.1} parent=11 // pred_region
          _
        $region24: #{tpu_custom_call.1} parent=11 // pred_fallthru
          _
        // Predicated region
        $region25: #{tpu_custom_call.1} parent=11 // pred_check
          %p400 = pneg %p215
        $region26: #{tpu_custom_call.1} parent=11 // pred_check_branch
          %402 = sbr.rel (%p400) target = $region28
        $region27: #{tpu_custom_call.1} parent=11 // pred_region
          _
        $region28: #{tpu_custom_call.1} parent=11 // pred_fallthru
          _
        // Predicated region
        $region29: #{tpu_custom_call.1} parent=11 // pred_check
          %p403 = pneg %p236
        $region30: #{tpu_custom_call.1} parent=11 // pred_check_branch
          %405 = sbr.rel (%p403) target = $region32
        $region31: #{tpu_custom_call.1} parent=11 // pred_region
          _
        $region32: #{tpu_custom_call.1} parent=11 // pred_fallthru
          _
        // Predicated region
        $region33: #{tpu_custom_call.1} parent=11 // pred_check
          %p406 = pneg %p257
        $region34: #{tpu_custom_call.1} parent=11 // pred_check_branch
          %408 = sbr.rel (%p406) target = $region36
        $region35: #{tpu_custom_call.1} parent=11 // pred_region
          _
        $region36: #{tpu_custom_call.1} parent=11 // pred_fallthru
          _
        // Predicated region
        $region37: #{tpu_custom_call.1} parent=11 // pred_check
          %p409 = pneg %p278
        $region38: #{tpu_custom_call.1} parent=11 // pred_check_branch
          %411 = sbr.rel (%p409) target = $region40
        $region39: #{tpu_custom_call.1} parent=11 // pred_region
          _
        $region40: #{tpu_custom_call.1} parent=11 // pred_fallthru
          _
        // Predicated region
        $region41: #{tpu_custom_call.1} parent=11 // pred_check
          %p412 = pneg %p299
        $region42: #{tpu_custom_call.1} parent=11 // pred_check_branch
          %414 = sbr.rel (%p412) target = $region44
        $region43: #{tpu_custom_call.1} parent=11 // pred_region
          _
        $region44: #{tpu_custom_call.1} parent=11 // pred_fallthru
          _
        // Predicated region
        $region45: #{tpu_custom_call.1} parent=11 // pred_check
          %p415 = pneg %p320
        $region46: #{tpu_custom_call.1} parent=11 // pred_check_branch
          %417 = sbr.rel (%p415) target = $region48
        $region47: #{tpu_custom_call.1} parent=11 // pred_region
          _
        $region48: #{tpu_custom_call.1} parent=11 // pred_fallthru
          _
      $region12: #{tpu_custom_call.1} parent=5 // pred_fallthru
        _
      %p418 = scmp.lt.s32.totalorder %s35, 2
      // Predicated region
      $region49: #{tpu_custom_call.1} parent=5 // pred_check
        %p419 = pneg %p418
      $region50: #{tpu_custom_call.1} parent=5 // pred_check_branch
        %421 = sbr.rel (%p419) target = $region52
      $region51: #{tpu_custom_call.1} parent=5 // pred_region
        // Predicated region
        $region53: #{tpu_custom_call.1} parent=51 // pred_check
          %p422 = pneg %p69
        $region54: #{tpu_custom_call.1} parent=51 // pred_check_branch
          %424 = sbr.rel (%p422) target = $region56
        $region55: #{tpu_custom_call.1} parent=51 // pred_region
          %p425 = scmp.lt.s32.totalorder %s42, 1
          %s426 = scalar_select %p425, %s42, 1
          %p427 = scmp.lt.s32.totalorder %s43, 0
          %s428 = scalar_select %p427, %s43, 0
          %s429 = sadd.s32 %s428, %s426
          %s430 = smul.addr %s429, 8
          %s431 = scalar_lea.vmem %s1, %s430
        $region56: #{tpu_custom_call.1} parent=51 // pred_fallthru
          _
        // Predicated region
        $region57: #{tpu_custom_call.1} parent=51 // pred_check
          %p432 = pneg %p97
        $region58: #{tpu_custom_call.1} parent=51 // pred_check_branch
          %434 = sbr.rel (%p432) target = $region60
        $region59: #{tpu_custom_call.1} parent=51 // pred_region
          %p435 = scmp.lt.s32.totalorder %s42, 1
          %s436 = scalar_select %p435, %s42, 1
          %p437 = scmp.lt.s32.totalorder %s43, 0
          %s438 = scalar_select %p437, %s43, 0
          %s439 = sadd.s32 %s438, %s436
          %s440 = smul.addr %s439, 4
          %s441 = scalar_lea.vmem %s2, %s440
        $region60: #{tpu_custom_call.1} parent=51 // pred_fallthru
          _
        // Predicated region
        $region61: #{tpu_custom_call.1} parent=51 // pred_check
          %p442 = pneg %p125
        $region62: #{tpu_custom_call.1} parent=51 // pred_check_branch
          %444 = sbr.rel (%p442) target = $region64
        $region63: #{tpu_custom_call.1} parent=51 // pred_region
          %p445 = scmp.lt.s32.totalorder %s42, 1
          %s446 = scalar_select %p445, %s42, 1
          %p447 = scmp.lt.s32.totalorder %s43, 0
          %s448 = scalar_select %p447, %s43, 0
          %s449 = sadd.s32 %s448, %s446
          %s450 = smul.addr %s449, 4
          %s451 = scalar_lea.vmem %s3, %s450
        $region64: #{tpu_custom_call.1} parent=51 // pred_fallthru
          _
      $region52: #{tpu_custom_call.1} parent=5 // pred_fallthru
        _
      %p452 = scmp.le.s32.totalorder 1, %s35
      %p453 = scmp.lt.s32.totalorder %s35, 3
      %p454 = pnand %p452, %p453
      %p455 = pneg %p454
      // Predicated region
      $region65: #{tpu_custom_call.1} parent=5 // pred_check
        _
      $region66: #{tpu_custom_call.1} parent=5 // pred_check_branch
        %457 = sbr.rel (%p454) target = $region68
      $region67: #{tpu_custom_call.1} parent=5 // pred_region
        %s458 = ssub.s32 %s35, 1
        %p459 = scmp.lt.s32.totalorder %s44, 1
        %s460 = scalar_select %p459, %s44, 1
        %p461 = scmp.lt.s32.totalorder %s45, 0
        %s462 = scalar_select %p461, %s45, 0
        %s463 = sadd.s32 %s462, %s460
        %s464 = smul.addr %s463, 8
        %s465 = scalar_lea.vmem %s1, %s464
        %p466 = pneg %p75
        %p467 = pneg %p72
        %p468 = scmp.lt.s32.totalorder %s44, 1
        %s469 = scalar_select %p468, %s44, 1
        %p470 = scmp.lt.s32.totalorder %s45, 0
        %s471 = scalar_select %p470, %s45, 0
        %s472 = sadd.s32 %s471, %s469
        %s473 = smul.addr %s472, 4
        %s474 = scalar_lea.vmem %s2, %s473
        %p475 = pneg %p103
        %p476 = pneg %p100
        %p477 = scmp.lt.s32.totalorder %s44, 1
        %s478 = scalar_select %p477, %s44, 1
        %p479 = scmp.lt.s32.totalorder %s45, 0
        %s480 = scalar_select %p479, %s45, 0
        %s481 = sadd.s32 %s480, %s478
        %s482 = smul.addr %s481, 4
        %s483 = scalar_lea.vmem %s3, %s482
        %p484 = pneg %p131
        %p485 = pneg %p128
        %p486 = pneg %p152
        %p487 = pneg %p149
        %p488 = pneg %p173
        %p489 = pneg %p170
        %p490 = pneg %p194
        %p491 = pneg %p191
        %p492 = pneg %p215
        %p493 = pneg %p212
        %p494 = pneg %p236
        %p495 = pneg %p233
        %p496 = pneg %p257
        %p497 = pneg %p254
        %p498 = pneg %p278
        %p499 = pneg %p275
        %p500 = pneg %p299
        %p501 = pneg %p296
        %p502 = pneg %p320
        %p503 = pneg %p317
        %p504 = pneg %p348
        %p505 = pneg %p345
        %s506 = sand.u32 %s335, 1
        %s507 = scalar_lea.sflag [#allocation5], %s506
        %s508 = sand.u32 %s335, 1
        %s509 = scalar_lea.vmem [#allocation4], %s508
        %p510 = pneg %p376
        %p511 = pneg %p373
        %s512 = sand.u32 %s363, 1
        %s513 = scalar_lea.sflag [#allocation7], %s512
        %s514 = sand.u32 %s363, 1
        %s515 = scalar_lea.vmem [#allocation6], %s514
        %p516 = scmp.lt.s32.totalorder %s44, 1
        %s517 = scalar_select %p516, %s44, 1
        %p518 = scmp.lt.s32.totalorder %s45, 0
        %s519 = scalar_select %p518, %s45, 0
        %s520 = sadd.s32 %s519, %s517
        %s521 = smul.addr %s520, 8
        %s522 = scalar_lea.vmem %s1, %s521
        %p523 = scmp.lt.s32.totalorder %s44, 1
        %s524 = scalar_select %p523, %s44, 1
        %p525 = scmp.lt.s32.totalorder %s45, 0
        %s526 = scalar_select %p525, %s45, 0
        %s527 = sadd.s32 %s526, %s524
        %s528 = smul.addr %s527, 4
        %s529 = scalar_lea.vmem %s2, %s528
        %p530 = scmp.lt.s32.totalorder %s44, 1
        %s531 = scalar_select %p530, %s44, 1
        %p532 = scmp.lt.s32.totalorder %s45, 0
        %s533 = scalar_select %p532, %s45, 0
        %s534 = sadd.s32 %s533, %s531
        %s535 = smul.addr %s534, 4
        %s536 = scalar_lea.vmem %s3, %s535
        %s537 = sld [smem:[#allocation3 + %s44]]
        %s538 = sshra.s32 %s44, 7
        %s539 = sand.u32 %s44, 127
        %s540 = sadd.s32 %s538, 1
        %s541 = smul.u32 %s540, 128
        %s542 = sshra.s32 %s44, 7
        %s543 = sand.u32 %s44, 127
        %s544 = sadd.s32 %s541, %s543
        %s545 = sld [smem:[#allocation3 + %s544]]
        %s546 = sadd.s32 %s538, 2
        %s547 = smul.u32 %s546, 128
        %s548 = sadd.s32 %s547, %s543
        %s549 = sld [smem:[#allocation3 + %s548]]
        %s550 = sadd.s32 %s538, 3
        %s551 = smul.u32 %s550, 128
        %s552 = sadd.s32 %s551, %s543
        %s553 = sld [smem:[#allocation3 + %s552]]
        %s554 = sadd.s32 %s538, 4
        %s555 = smul.u32 %s554, 128
        %s556 = sadd.s32 %s555, %s543
        %s557 = sld [smem:[#allocation3 + %s556]]
        %v558 = vld [vmem:[%s522] sm:$0x3f]
        %v559 = vld [vmem:[%s529] sm:$0x7]
        %v560 = vunpack.c.l.bf16 %v559
        %v561 = vld [vmem:[%s536] sm:$0x7]
        %v562 = vunpack.c.l.bf16 %v561
        %v563 = vstv %s537
        %v564 = vmul.f32 %v563, %v558
        %v565 = vstv %s545
        %v566 = vmul.f32 %v565, %v562
        %v567 = vadd.f32 %v564, %v566
        %v568 = vld [vmem:[%s4] sm:$0x3f]
        %v569 = vld [vmem:[%s5] sm:$0x3f]
        %vm570 = vcmask 48128
        %v572 = vsel %vm570, %v569, 0
        %vm574 = vcmask 1045504
        %v576 = vsel %vm574, %v560, 0
        %578 = vmatpush.msra.mxu0 0.0
        %579 = vmatpush.msra.mxu0 0.0
        %580 = vmatpush.msra.mxu0 0.0
        %581 = vmatpush.msra.mxu0 0.0
        %582 = vmatpush.msra.mxu0 0.0
        %583 = vmatpush.msra.mxu0 0.0
        %584 = vmatpush.msra.mxu0 0.0
        %585 = vmatpush.msra.mxu0 0.0
        %586 = vmatpush.msra.mxu0 0.0
        %587 = vmatpush.msra.mxu0 0.0
        %588 = vmatpush.msra.mxu0 0.0
        %589 = vmatpush.msra.mxu0 0.0
        %590 = vmatpush.msra.mxu0 0.0
        %591 = vmatpush.msra.mxu0 0.0
        %592 = vmatpush.msra.mxu0 0.0
        %593 = vmatpush.msra.mxu0 %v576
        %594 = vmatmul.f32.gmra.mxu0 %v572
        %v595 = vpop.f32.mrf.mxu0
        %v596 = vadd.f32 0.0, %v595
        %597 = vdwg.mxu0
        %v599 = vsel %vm570, %v568, 0
        %v602 = vsel %vm574, %v558, 0
        %604 = vmatpush.msra.mxu0 0.0
        %605 = vmatpush.msra.mxu0 0.0
        %606 = vmatpush.msra.mxu0 0.0
        %607 = vmatpush.msra.mxu0 0.0
        %608 = vmatpush.msra.mxu0 0.0
        %609 = vmatpush.msra.mxu0 0.0
        %610 = vmatpush.msra.mxu0 0.0
        %611 = vmatpush.msra.mxu0 0.0
        %612 = vmatpush.msra.mxu0 0.0
        %613 = vmatpush.msra.mxu0 0.0
        %614 = vmatpush.msra.mxu0 0.0
        %615 = vmatpush.msra.mxu0 0.0
        %616 = vmatpush.msra.mxu0 0.0
        %617 = vmatpush.msra.mxu0 0.0
        %618 = vmatpush.msra.mxu0 0.0
        %619 = vmatpush.msra.mxu0 %v602
        %620 = vmatmul.f32.gmra.mxu0 %v599
        %v621 = vpop.f32.mrf.mxu0
        %v622 = vadd.f32 %v596, %v621
        %623 = vdwg.mxu0
        %v624 = vld [vmem:[%s6] sm:$0x3f]
        %626 = vset.pattern.permute.xlu0 0
        %627 = vperm.xlu0 %626, %v624
        %v628 = vpop.permute.xlu0 %627
        %v630 = vadd.f32 %v622, %v628
        %v631 = vtanh.pop %v630
        %v632 = vld [vmem:[%s10] sm:$0xff]
        %v633 = vld [vmem:[%s10 + $0x8] sm:$0xff]
        %v634 = vld [vmem:[%s10 + $0x10] sm:$0xff]
        %v635 = vld [vmem:[%s10 + $0x18] sm:$0xff]
        %v636 = vld [vmem:[%s10 + $0x20] sm:$0xff]
        %v637 = vld [vmem:[%s10 + $0x28] sm:$0xff]
        %v638 = vld [vmem:[%s10 + $0x30] sm:$0xff]
        %v639 = vld [vmem:[%s10 + $0x38] sm:$0xff]
        %v640 = vld [vmem:[%s9] sm:$0xff]
        %v641 = vld [vmem:[%s9 + $0x8] sm:$0xff]
        %v642 = vld [vmem:[%s9 + $0x10] sm:$0xff]
        %v643 = vld [vmem:[%s9 + $0x18] sm:$0xff]
        %v644 = vld [vmem:[%s9 + $0x20] sm:$0xff]
        %v645 = vld [vmem:[%s9 + $0x28] sm:$0xff]
        %v646 = vld [vmem:[%s9 + $0x30] sm:$0xff]
        %v647 = vld [vmem:[%s9 + $0x38] sm:$0xff]
        %v648 = vstv %s557
        %v649 = vmul.f32 %v648, %v640
        %v650 = vmul.f32 %v648, %v641
        %v651 = vmul.f32 %v648, %v642
        %v652 = vmul.f32 %v648, %v643
        %v653 = vmul.f32 %v648, %v644
        %v654 = vmul.f32 %v648, %v645
        %v655 = vmul.f32 %v648, %v646
        %v656 = vmul.f32 %v648, %v647
        %v657 = vadd.f32 %v632, %v649
        %v658 = vadd.f32 %v633, %v650
        %v659 = vadd.f32 %v634, %v651
        %v660 = vadd.f32 %v635, %v652
        %v661 = vadd.f32 %v636, %v653
        %v662 = vadd.f32 %v637, %v654
        %v663 = vadd.f32 %v638, %v655
        %v664 = vadd.f32 %v639, %v656
        %v665 = vld [vmem:[%s7] sm:$0xff]
        %v666 = vld [vmem:[%s7 + $0x8] sm:$0xff]
        %v667 = vld [vmem:[%s7 + $0x10] sm:$0xff]
        %v668 = vld [vmem:[%s7 + $0x18] sm:$0xff]
        %v669 = vld [vmem:[%s7 + $0x20] sm:$0xff]
        %v670 = vld [vmem:[%s7 + $0x28] sm:$0xff]
        %v671 = vld [vmem:[%s7 + $0x30] sm:$0xff]
        %v672 = vld [vmem:[%s7 + $0x38] sm:$0xff]
        %v673 = vld [vmem:[%s8] sm:$0xff]
        %v674 = vld [vmem:[%s8 + $0x8] sm:$0xff]
        %v675 = vld [vmem:[%s8 + $0x10] sm:$0xff]
        %v676 = vld [vmem:[%s8 + $0x18] sm:$0xff]
        %v677 = vld [vmem:[%s8 + $0x20] sm:$0xff]
        %v678 = vld [vmem:[%s8 + $0x28] sm:$0xff]
        %v679 = vld [vmem:[%s8 + $0x30] sm:$0xff]
        %v680 = vld [vmem:[%s8 + $0x38] sm:$0xff]
        %v682 = vsel %vm570, %v673, 0
        %v685 = vsel %vm570, %v674, 0
        %v688 = vsel %vm570, %v675, 0
        %v691 = vsel %vm570, %v676, 0
        %v694 = vsel %vm570, %v677, 0
        %v697 = vsel %vm570, %v678, 0
        %v700 = vsel %vm570, %v679, 0
        %v703 = vsel %vm570, %v680, 0
        %v706 = vsel %vm574, %v631, 0
        %708 = vmatpush.msra.mxu0 0.0
        %709 = vmatpush.msra.mxu0 0.0
        %710 = vmatpush.msra.mxu0 0.0
        %711 = vmatpush.msra.mxu0 0.0
        %712 = vmatpush.msra.mxu0 0.0
        %713 = vmatpush.msra.mxu0 0.0
        %714 = vmatpush.msra.mxu0 0.0
        %715 = vmatpush.msra.mxu0 0.0
        %716 = vmatpush.msra.mxu0 0.0
        %717 = vmatpush.msra.mxu0 0.0
        %718 = vmatpush.msra.mxu0 0.0
        %719 = vmatpush.msra.mxu0 0.0
        %720 = vmatpush.msra.mxu0 0.0
        %721 = vmatpush.msra.mxu0 0.0
        %722 = vmatpush.msra.mxu0 0.0
        %723 = vmatpush.msra.mxu0 %v706
        %724 = vmatmul.f32.gmra.mxu0 %v682
        %v725 = vpop.f32.mrf.mxu0
        %v726 = vadd.f32 0.0, %v725
        %727 = vmatmul.f32.gmra.mxu0 %v685
        %v728 = vpop.f32.mrf.mxu0
        %v729 = vadd.f32 0.0, %v728
        %730 = vmatmul.f32.gmra.mxu0 %v688
        %v731 = vpop.f32.mrf.mxu0
        %v732 = vadd.f32 0.0, %v731
        %733 = vmatmul.f32.gmra.mxu0 %v691
        %v734 = vpop.f32.mrf.mxu0
        %v735 = vadd.f32 0.0, %v734
        %736 = vmatmul.f32.gmra.mxu0 %v694
        %v737 = vpop.f32.mrf.mxu0
        %v738 = vadd.f32 0.0, %v737
        %739 = vmatmul.f32.gmra.mxu0 %v697
        %v740 = vpop.f32.mrf.mxu0
        %v741 = vadd.f32 0.0, %v740
        %742 = vmatmul.f32.gmra.mxu0 %v700
        %v743 = vpop.f32.mrf.mxu0
        %v744 = vadd.f32 0.0, %v743
        %745 = vmatmul.f32.gmra.mxu0 %v703
        %v746 = vpop.f32.mrf.mxu0
        %v747 = vadd.f32 0.0, %v746
        %748 = vdwg.mxu0
        %v750 = vsel %vm570, %v665, 0
        %v753 = vsel %vm570, %v666, 0
        %v756 = vsel %vm570, %v667, 0
        %v759 = vsel %vm570, %v668, 0
        %v762 = vsel %vm570, %v669, 0
        %v765 = vsel %vm570, %v670, 0
        %v768 = vsel %vm570, %v671, 0
        %v771 = vsel %vm570, %v672, 0
        %v774 = vsel %vm574, %v567, 0
        %776 = vmatpush.msra.mxu0 0.0
        %777 = vmatpush.msra.mxu0 0.0
        %778 = vmatpush.msra.mxu0 0.0
        %779 = vmatpush.msra.mxu0 0.0
        %780 = vmatpush.msra.mxu0 0.0
        %781 = vmatpush.msra.mxu0 0.0
        %782 = vmatpush.msra.mxu0 0.0
        %783 = vmatpush.msra.mxu0 0.0
        %784 = vmatpush.msra.mxu0 0.0
        %785 = vmatpush.msra.mxu0 0.0
        %786 = vmatpush.msra.mxu0 0.0
        %787 = vmatpush.msra.mxu0 0.0
        %788 = vmatpush.msra.mxu0 0.0
        %789 = vmatpush.msra.mxu0 0.0
        %790 = vmatpush.msra.mxu0 0.0
        %791 = vmatpush.msra.mxu0 %v774
        %792 = vmatmul.f32.gmra.mxu0 %v750
        %v793 = vpop.f32.mrf.mxu0
        %v794 = vadd.f32 %v726, %v793
        %795 = vmatmul.f32.gmra.mxu0 %v753
        %v796 = vpop.f32.mrf.mxu0
        %v797 = vadd.f32 %v729, %v796
        %798 = vmatmul.f32.gmra.mxu0 %v756
        %v799 = vpop.f32.mrf.mxu0
        %v800 = vadd.f32 %v732, %v799
        %801 = vmatmul.f32.gmra.mxu0 %v759
        %v802 = vpop.f32.mrf.mxu0
        %v803 = vadd.f32 %v735, %v802
        %804 = vmatmul.f32.gmra.mxu0 %v762
        %v805 = vpop.f32.mrf.mxu0
        %v806 = vadd.f32 %v738, %v805
        %807 = vmatmul.f32.gmra.mxu0 %v765
        %v808 = vpop.f32.mrf.mxu0
        %v809 = vadd.f32 %v741, %v808
        %810 = vmatmul.f32.gmra.mxu0 %v768
        %v811 = vpop.f32.mrf.mxu0
        %v812 = vadd.f32 %v744, %v811
        %813 = vmatmul.f32.gmra.mxu0 %v771
        %v814 = vpop.f32.mrf.mxu0
        %v815 = vadd.f32 %v747, %v814
        %816 = vdwg.mxu0
        %818 = vset.pattern.permute.xlu0 0
        %819 = vperm.xlu0 %818, %v657
        %v820 = vpop.permute.xlu0 %819
        %823 = vset.pattern.permute.xlu0 0
        %824 = vperm.xlu0 %823, %v658
        %v825 = vpop.permute.xlu0 %824
        %828 = vset.pattern.permute.xlu0 0
        %829 = vperm.xlu0 %828, %v659
        %v830 = vpop.permute.xlu0 %829
        %833 = vset.pattern.permute.xlu0 0
        %834 = vperm.xlu0 %833, %v660
        %v835 = vpop.permute.xlu0 %834
        %838 = vset.pattern.permute.xlu0 0
        %839 = vperm.xlu0 %838, %v661
        %v840 = vpop.permute.xlu0 %839
        %843 = vset.pattern.permute.xlu0 0
        %844 = vperm.xlu0 %843, %v662
        %v845 = vpop.permute.xlu0 %844
        %848 = vset.pattern.permute.xlu0 0
        %849 = vperm.xlu0 %848, %v663
        %v850 = vpop.permute.xlu0 %849
        %853 = vset.pattern.permute.xlu0 0
        %854 = vperm.xlu0 %853, %v664
        %v855 = vpop.permute.xlu0 %854
        %v857 = vadd.f32 %v794, %v820
        %v858 = vadd.f32 %v797, %v825
        %v859 = vadd.f32 %v800, %v830
        %v860 = vadd.f32 %v803, %v835
        %v861 = vadd.f32 %v806, %v840
        %v862 = vadd.f32 %v809, %v845
        %v863 = vadd.f32 %v812, %v850
        %v864 = vadd.f32 %v815, %v855
        %v865 = vmax.f32 %v857, 0.0
        %v866 = vmax.f32 %v858, 0.0
        %v867 = vmax.f32 %v859, 0.0
        %v868 = vmax.f32 %v860, 0.0
        %v869 = vmax.f32 %v861, 0.0
        %v870 = vmax.f32 %v862, 0.0
        %v871 = vmax.f32 %v863, 0.0
        %v872 = vmax.f32 %v864, 0.0
        %v873 = vld [vmem:[%s11] sm:$0x3f]
        %v874 = vld [vmem:[%s12] sm:$0x3f]
        %876 = vset.pattern.permute.xlu0 0
        %877 = vperm.xlu0 %876, %v874
        %v878 = vpop.permute.xlu0 %877
        %vm880 = vcmask 523264
        %v882 = vsel %vm880, %v873, 0
        %884 = vmatpush.msra.mxu0 0.0
        %885 = vmatpush.msra.mxu0 0.0
        %886 = vmatpush.msra.mxu0 0.0
        %887 = vmatpush.msra.mxu0 0.0
        %888 = vmatpush.msra.mxu0 0.0
        %889 = vmatpush.msra.mxu0 0.0
        %890 = vmatpush.msra.mxu0 0.0
        %891 = vmatpush.msra.mxu0 0.0
        %892 = vmatpush.msra.mxu0 %v872
        %893 = vmatpush.msra.mxu0 %v871
        %894 = vmatpush.msra.mxu0 %v870
        %895 = vmatpush.msra.mxu0 %v869
        %896 = vmatpush.msra.mxu0 %v868
        %897 = vmatpush.msra.mxu0 %v867
        %898 = vmatpush.msra.mxu0 %v866
        %899 = vmatpush.msra.mxu0 %v865
        %900 = vmatmul.f32.gmra.mxu0 %v882
        %v901 = vpop.f32.mrf.mxu0
        %v902 = vadd.f32 %v878, %v901
        %903 = vdwg.mxu0
        %v904 = vstv %s549
        %v905 = vmul.f32 %v904, %v567
        %v906 = vstv %s553
        %v907 = vmul.f32 %v906, %v902
        %v908 = vsub.f32 %v905, %v907
        %v909 = vsub.f32 %v902, %v562
        %v910 = vmul.f32 %v909, %v909
        %v911 = vsel %vm574, %v910, 0.0
        %v912 = vrot.slane %v911, 4
        %v913 = vadd.f32 %v911, %v912
        %v914 = vrot.slane %v913, 2
        %v915 = vadd.f32 %v913, %v914
        %v916 = vrot.slane %v915, 1
        %v917 = vadd.f32 %v915, %v916
        %918 = vst [vmem:[%s509] sm:$0x1] %v917
        %v919 = vsub.f32 %v908, %v558
        %v920 = vmul.f32 %v919, %v919
        %v921 = vsel %vm574, %v920, 0.0
        %v922 = vrot.slane %v921, 4
        %v923 = vadd.f32 %v921, %v922
        %v924 = vrot.slane %v923, 2
        %v925 = vadd.f32 %v923, %v924
        %v926 = vrot.slane %v925, 1
        %v927 = vadd.f32 %v925, %v926
        %928 = vst [vmem:[%s515] sm:$0x1] %v927
        %s929 = sand.u32 %s335, 1
        %s930 = scalar_lea.sflag [#allocation5], %s929
        %s931 = sand.u32 %s335, 1
        %s932 = scalar_lea.vmem [#allocation4], %s931
        %s933 = sand.u32 %s363, 1
        %s934 = scalar_lea.sflag [#allocation7], %s933
        %s935 = sand.u32 %s363, 1
        %s936 = scalar_lea.vmem [#allocation6], %s935
        // Predicated region
        $region69: #{tpu_custom_call.1} parent=67 // pred_check
          %p937 = pneg %p345
        $region70: #{tpu_custom_call.1} parent=67 // pred_check_branch
          %939 = sbr.rel (%p937) target = $region72
        $region71: #{tpu_custom_call.1} parent=67 // pred_region
          %941 = vsyncadd %s930, 0
          %s942 = sadd.s32 %s45, %s44
          %s943 = scalar_lea.hbm %s13, %s942
          %s945 = sshll.u32 %s932, 4
          %s946 = int_to_ptr.vmem [resolvable:$true] %s945
          %s947 = sshll.u32 %s943, 4
          %s948 = int_to_ptr.hbm [resolvable:$true] %s947
          %950 = dma.vmem_to_hbm [thread:$0]  %s946, 16, %s948, %s930
        $region72: #{tpu_custom_call.1} parent=67 // pred_fallthru
          _
        // Predicated region
        $region73: #{tpu_custom_call.1} parent=67 // pred_check
          %p951 = pneg %p373
        $region74: #{tpu_custom_call.1} parent=67 // pred_check_branch
          %953 = sbr.rel (%p951) target = $region76
        $region75: #{tpu_custom_call.1} parent=67 // pred_region
          %955 = vsyncadd %s934, 0
          %s956 = sadd.s32 %s45, %s44
          %s957 = scalar_lea.hbm %s14, %s956
          %s959 = sshll.u32 %s936, 4
          %s960 = int_to_ptr.vmem [resolvable:$true] %s959
          %s961 = sshll.u32 %s957, 4
          %s962 = int_to_ptr.hbm [resolvable:$true] %s961
          %964 = dma.vmem_to_hbm [thread:$0]  %s960, 16, %s962, %s934
        $region76: #{tpu_custom_call.1} parent=67 // pred_fallthru
          _
      $region68: #{tpu_custom_call.1} parent=5 // pred_fallthru
        _
      %p965 = scmp.le.s32.totalorder 2, %s35
      // Predicated region
      $region77: #{tpu_custom_call.1} parent=5 // pred_check
        %p966 = pneg %p965
      $region78: #{tpu_custom_call.1} parent=5 // pred_check_branch
        %968 = sbr.rel (%p966) target = $region80
      $region79: #{tpu_custom_call.1} parent=5 // pred_region
        %s969 = ssub.s32 %s35, 2
        // Predicated region
        $region81: #{tpu_custom_call.1} parent=79 // pred_check
          %p970 = pneg %p351
        $region82: #{tpu_custom_call.1} parent=79 // pred_check_branch
          %972 = sbr.rel (%p970) target = $region84
        $region83: #{tpu_custom_call.1} parent=79 // pred_region
          %s973 = sand.u32 %s336, 1
          %s974 = scalar_lea.sflag [#allocation5], %s973
          %s975 = sand.u32 %s336, 1
          %s976 = scalar_lea.vmem [#allocation4], %s975
          %978 = dma.done %s974, 16
        $region84: #{tpu_custom_call.1} parent=79 // pred_fallthru
          _
        // Predicated region
        $region85: #{tpu_custom_call.1} parent=79 // pred_check
          %p979 = pneg %p379
        $region86: #{tpu_custom_call.1} parent=79 // pred_check_branch
          %981 = sbr.rel (%p979) target = $region88
        $region87: #{tpu_custom_call.1} parent=79 // pred_region
          %s982 = sand.u32 %s364, 1
          %s983 = scalar_lea.sflag [#allocation7], %s982
          %s984 = sand.u32 %s364, 1
          %s985 = scalar_lea.vmem [#allocation6], %s984
          %987 = dma.done %s983, 16
        $region88: #{tpu_custom_call.1} parent=79 // pred_fallthru
          _
      $region80: #{tpu_custom_call.1} parent=5 // pred_fallthru
        _
    $region6: #{tpu_custom_call.1} parent=1 // loop_footer
      %s39 = sadd.s32 1, %s35
    $region7: #{tpu_custom_call.1} parent=1 // loop_footer_branch
      %34 = sbr.rel target = $region3
    $region8: #{tpu_custom_call.1} parent=1 // loop_exit
      _
    %988 = vsyncpa [#allocation5], 1
    %s989 = scalar_lea.sflag [#allocation5], 1
    %990 = vsyncpa %s989, 1
    %991 = vsyncpa [#allocation7], 1
    %s992 = scalar_lea.sflag [#allocation7], 1
    %993 = vsyncpa %s992, 1

</llo_original>
